<compile_context>
chip_gen: v7x
topology: tpu7x:2x2x1
jax: 0.10.0
libtpu: 0.0.40
codegen_flags: <defaults>
</compile_context>

<pallas_src>
import math
import functools

import jax
import jax.numpy as jnp
from jax.experimental import pallas as pl
from jax.experimental.pallas import tpu as pltpu


def _exp_normal_smearing_kernel(dist_ref, means_ref, neg_betas_ref, out_ref,
                                *, cutoff_upper, alpha, alpha_cl):
    d = dist_ref[...]                # (1, tile_e)  f32, lane-dense
    means = means_ref[...]           # (R, 1)       f32
    neg_betas = neg_betas_ref[...]   # (R, 1)       f32  (already negated)

    # CosineCutoff(0, cutoff_upper): 0.5*(cos(d*pi/upper)+1) * (d < upper)
    cutoff = jnp.where(d < cutoff_upper,
                       0.5 * jnp.cos(d * (math.pi / cutoff_upper)) + 0.5,
                       0.0)                                        # (1, tile_e)

    # exp(-betas * (exp(alpha*(cutoff_lower - d)) - means)^2)      -> (R, tile_e)
    expo = jnp.exp(alpha_cl - alpha * d)                           # (1, tile_e)
    diff = expo - means                                            # (R, tile_e)
    out_ref[...] = (cutoff * jnp.exp(neg_betas * (diff * diff))).astype(out_ref.dtype)


def exp_normal_smearing(dist, means, betas, *,
                        cutoff_lower=0.0, cutoff_upper=5.0,
                        tile_e=32768, out_dtype=jnp.float32,
                        pytorch_layout=False):
    """dist: (E,) f32; means/betas: (num_rbf,) f32.

    Returns (num_rbf, E) by default (lane-dense, no extra HBM pass).
    Set pytorch_layout=True to get the PyTorch (E, num_rbf) layout (costs one
    XLA transpose; prefer folding the transpose into the downstream consumer).
    """
    E = int(dist.shape[0])
    R = int(means.shape[0])
    alpha = 5.0 / (cutoff_upper - cutoff_lower)

    # Big, lane-aligned tile to amortize the ~0.35 us/step pipeline overhead;
    # capped so the grid keeps >= 4 steps (v7x: 2 TensorCores share the single
    # 'parallel' grid axis) and so small inputs are not over-padded.
    cap = 128 * pl.cdiv(pl.cdiv(E, 4), 128)
    tile_e_eff = max(128, min(int(tile_e), cap))
    E_pad = pl.cdiv(E, tile_e_eff) * tile_e_eff
    grid_e = E_pad // tile_e_eff

    dist_row = jnp.pad(dist.astype(jnp.float32), (0, E_pad - E)).reshape(1, E_pad)
    means_col = means.reshape(R, 1).astype(jnp.float32)
    neg_betas_col = (-betas).reshape(R, 1).astype(jnp.float32)

    out_itemsize = jnp.dtype(out_dtype).itemsize
    # Double-buffered output + input blocks + headroom (covers v5e's 16 MiB default).
    vmem_limit = int(2 * (R * tile_e_eff * out_itemsize + tile_e_eff * 4 + 2 * R * 4)
                     + (4 << 20))

    kernel = functools.partial(_exp_normal_smearing_kernel,
                               cutoff_upper=float(cutoff_upper),
                               alpha=float(alpha),
                               alpha_cl=float(alpha * cutoff_lower))

    out_t = pl.pallas_call(
        kernel,
        out_shape=jax.ShapeDtypeStruct((R, E_pad), out_dtype),
        grid_spec=pltpu.PrefetchScalarGridSpec(
            num_scalar_prefetch=0,
            grid=(grid_e,),
            in_specs=[
                pl.BlockSpec((1, tile_e_eff), lambda i: (0, i)),   # dist (lane-dense)
                pl.BlockSpec((R, 1), lambda i: (0, 0)),            # means (replicated)
                pl.BlockSpec((R, 1), lambda i: (0, 0)),            # -betas (replicated)
            ],
            out_specs=pl.BlockSpec((R, tile_e_eff), lambda i: (0, i)),
        ),
        compiler_params=pltpu.CompilerParams(
            dimension_semantics=("parallel",),
            vmem_limit_bytes=vmem_limit),
        cost_estimate=pl.CostEstimate(
            flops=6 * E_pad * R + 3 * E_pad,
            transcendentals=E_pad * R + 2 * E_pad,
            bytes_accessed=E_pad * R * out_itemsize + E_pad * 4 + 2 * R * 4),
    )(dist_row, means_col, neg_betas_col)

    if E_pad != E:
        out_t = out_t[:, :E]
    if pytorch_layout:
        # Extra HBM pass; kept out of the kernel on purpose (keeps stores lane-dense).
        return out_t.T
    return out_t


def make_params(cutoff_lower=0.0, cutoff_upper=5.0, num_rbf=50):
    """Deterministic parameter init matching ExpNormalSmearing._initial_params."""
    start_value = jnp.exp(jnp.asarray(-cutoff_upper + cutoff_lower, dtype=jnp.float32))
    means = jnp.linspace(start_value, 1.0, num_rbf, dtype=jnp.float32)
    betas = jnp.full((num_rbf,),
                     (2.0 / num_rbf * (1.0 - start_value)) ** (-2),
                     dtype=jnp.float32)
    return means, betas


def reference(dist, means, betas, *, cutoff_lower=0.0, cutoff_upper=5.0):
    """Pure-JAX reference mirroring the PyTorch forward (cutoff_fn = CosineCutoff(0, upper))."""
    alpha = 5.0 / (cutoff_upper - cutoff_lower)
    d = dist[:, None]
    cutoff = 0.5 * (jnp.cos(d * math.pi / cutoff_upper) + 1.0)
    cutoff = cutoff * (d < cutoff_upper).astype(d.dtype)
    return cutoff * jnp.exp(-betas[None, :] *
                            (jnp.exp(alpha * (-d + cutoff_lower)) - means[None, :]) ** 2)


if __name__ == "__main__":
    num_rbf = 50
    key = jax.random.PRNGKey(0)

    # 1) Default cutoffs, ragged E (exercises padding), preferred (num_rbf, E) layout.
    # 2) Nonzero cutoff_lower, PyTorch (E, num_rbf) layout.
    # 3) bf16 output path (loose tolerance).
    configs = [
        dict(cutoff_lower=0.0, cutoff_upper=5.0, E=200,
             out_dtype=jnp.float32, pytorch_layout=False, atol=1e-5, rtol=1e-5),
        dict(cutoff_lower=1.0, cutoff_upper=5.0, E=256,
             out_dtype=jnp.float32, pytorch_layout=True, atol=1e-5, rtol=1e-5),
        dict(cutoff_lower=0.0, cutoff_upper=5.0, E=384,
             out_dtype=jnp.bfloat16, pytorch_layout=False, atol=1e-2, rtol=2e-2),
    ]

    for cfg in configs:
        cl, cu, E = cfg["cutoff_lower"], cfg["cutoff_upper"], cfg["E"]
        key, sub = jax.random.split(key)
        dist = jax.random.uniform(sub, (E,), dtype=jnp.float32,
                                  minval=0.0, maxval=cu + 1.0)
        means, betas = make_params(cl, cu, num_rbf)

        out = exp_normal_smearing(dist, means, betas,
                                  cutoff_lower=cl, cutoff_upper=cu,
                                  out_dtype=cfg["out_dtype"],
                                  pytorch_layout=cfg["pytorch_layout"])
        out = jax.block_until_ready(out)

        ref = reference(dist, means, betas, cutoff_lower=cl, cutoff_upper=cu)
        if not cfg["pytorch_layout"]:
            ref = ref.T                           # kernel's native (num_rbf, E) layout
        assert out.shape == ref.shape, f"shape mismatch for cfg={cfg}"
        assert jnp.allclose(out.astype(jnp.float32), ref,
                            atol=cfg["atol"], rtol=cfg["rtol"]), \
            f"mismatch vs reference for cfg={cfg}"

    print("KERNEL_OK")
</pallas_src>

<mosaic_0001>
module attributes {stable_mosaic.version = 11 : i64} {
  func.func @_exp_normal_smearing_kernel(%arg0: i32, %arg1: memref<1x128xf32, #tpu.memory_space<vmem>>, %arg2: memref<50x1xf32, #tpu.memory_space<vmem>>, %arg3: memref<50x1xf32, #tpu.memory_space<vmem>>, %arg4: memref<50x128xf32, #tpu.memory_space<vmem>>) attributes {dimension_semantics = [#tpu.dimension_semantics<parallel>], iteration_bounds = array<i64: 2>, scalar_prefetch = 0 : i64, scratch_operands = 0 : i64, tpu.core_type = #tpu.core_type<tc>, window_params = [{transform_indices = @transform_0, window_bounds = array<i64: 1, 128>}, {pipeline_mode = #tpu.pipeline_mode<synchronous>, transform_indices = @transform_1, window_bounds = array<i64: 50, 1>}, {pipeline_mode = #tpu.pipeline_mode<synchronous>, transform_indices = @transform_2, window_bounds = array<i64: 50, 1>}, {transform_indices = @transform_3, window_bounds = array<i64: 50, 128>}]} {
    %c0 = arith.constant 0 : index
    %c0_0 = arith.constant 0 : index
    %0 = vector.load %arg1[%c0, %c0_0] : memref<1x128xf32, #tpu.memory_space<vmem>>, vector<1x128xf32>
    %c0_1 = arith.constant 0 : index
    %c0_2 = arith.constant 0 : index
    %1 = vector.load %arg2[%c0_1, %c0_2] : memref<50x1xf32, #tpu.memory_space<vmem>>, vector<50x1xf32>
    %c0_3 = arith.constant 0 : index
    %c0_4 = arith.constant 0 : index
    %2 = vector.load %arg3[%c0_3, %c0_4] : memref<50x1xf32, #tpu.memory_space<vmem>>, vector<50x1xf32>
    %cst = arith.constant 5.000000e+00 : f32
    %3 = vector.broadcast %cst : f32 to vector<1x128xf32>
    %4 = arith.cmpf olt, %0, %3 : vector<1x128xf32>
    %cst_5 = arith.constant 0.628318548 : f32
    %5 = vector.broadcast %cst_5 : f32 to vector<1x128xf32>
    %6 = arith.mulf %0, %5 : vector<1x128xf32>
    %7 = math.cos %6 : vector<1x128xf32>
    %cst_6 = arith.constant 5.000000e-01 : f32
    %8 = vector.broadcast %cst_6 : f32 to vector<1x128xf32>
    %9 = arith.mulf %8, %7 : vector<1x128xf32>
    %cst_7 = arith.constant 5.000000e-01 : f32
    %10 = vector.broadcast %cst_7 : f32 to vector<1x128xf32>
    %11 = arith.addf %9, %10 : vector<1x128xf32>
    %cst_8 = arith.constant 0.000000e+00 : f32
    %12 = vector.broadcast %cst_8 : f32 to vector<1x128xf32>
    %13 = arith.select %4, %11, %12 : vector<1x128xi1>, vector<1x128xf32>
    %cst_9 = arith.constant 1.000000e+00 : f32
    %14 = vector.broadcast %cst_9 : f32 to vector<1x128xf32>
    %15 = arith.mulf %14, %0 : vector<1x128xf32>
    %cst_10 = arith.constant 0.000000e+00 : f32
    %16 = vector.broadcast %cst_10 : f32 to vector<1x128xf32>
    %17 = arith.subf %16, %15 : vector<1x128xf32>
    %18 = math.exp %17 : vector<1x128xf32>
    %19 = vector.broadcast %18 : vector<1x128xf32> to vector<50x128xf32>
    %20 = vector.broadcast %1 : vector<50x1xf32> to vector<50x128xf32>
    %21 = arith.subf %19, %20 : vector<50x128xf32>
    %22 = arith.mulf %21, %21 : vector<50x128xf32>
    %23 = vector.broadcast %2 : vector<50x1xf32> to vector<50x128xf32>
    %24 = arith.mulf %23, %22 : vector<50x128xf32>
    %25 = math.exp %24 : vector<50x128xf32>
    %26 = vector.broadcast %13 : vector<1x128xf32> to vector<50x128xf32>
    %27 = arith.mulf %26, %25 : vector<50x128xf32>
    %c0_11 = arith.constant 0 : index
    %c0_12 = arith.constant 0 : index
    %28 = vector.load %arg4[%c0_11, %c0_12] : memref<50x128xf32, #tpu.memory_space<vmem>>, vector<50x128xf32>
    tpu.vector_store %arg4[%c0_11, %c0_12], %27 {strides = array<i32>} : memref<50x128xf32, #tpu.memory_space<vmem>>, vector<50x128xf32>,
    return
  }
  func.func @transform_0(%arg0: i32) -> (i32, i32) {
    %c0_i32 = arith.constant 0 : i32
    %c0_i32_0 = arith.constant 0 : i32
    return %c0_i32, %arg0 : i32, i32
  }
  func.func @transform_1(%arg0: i32) -> (i32, i32) {
    %c0_i32 = arith.constant 0 : i32
    %c0_i32_0 = arith.constant 0 : i32
    %c0_i32_1 = arith.constant 0 : i32
    return %c0_i32, %c0_i32_0 : i32, i32
  }
  func.func @transform_2(%arg0: i32) -> (i32, i32) {
    %c0_i32 = arith.constant 0 : i32
    %c0_i32_0 = arith.constant 0 : i32
    %c0_i32_1 = arith.constant 0 : i32
    return %c0_i32, %c0_i32_0 : i32, i32
  }
  func.func @transform_3(%arg0: i32) -> (i32, i32) {
    %c0_i32 = arith.constant 0 : i32
    %c0_i32_0 = arith.constant 0 : i32
    return %c0_i32, %arg0 : i32, i32
  }
}

</mosaic_0001>

<llo_original>
// kernel: tpu_custom_call.1
$region0: #{tpu_custom_call.1}
  #allocation0 [shape = 'u32[]', space=smem, size = 0x4, offset = 0x4, fixed_abs, tag = 'smem constant byte address 0x4 - core index']
  #allocation1 [shape = 'u32[144,128]{1,0:T(1,128)}', space=vmem, size = 0x12000, scoped, tag = 'internal scratch']
  %s0 = inlined_call_operand.vmem [shape: f32[1,256], index: 0, kind: input, shape index: {}]
  %s1 = inlined_call_operand.vmem [shape: f32[50,1], index: 1, kind: input, shape index: {}]
  %s2 = inlined_call_operand.vmem [shape: f32[50,1], index: 2, kind: input, shape index: {}]
  %s3 = inlined_call_operand.hbm [shape: f32[50,256], index: 3, kind: output, shape index: {}]
  %s4 = sld [smem:[#allocation0]]
  $region45: #{tpu_custom_call.1} parent=0
    _
  %s6 = ssub.s32 1, %s4
  %s7 = scalar_select 0, %s6, %s4
  $region1: #{tpu_custom_call.1} parent=0
    #allocation2 [shape = 'u8[57344]{0}', space=vmem, size = 0xe000, scoped, tag = 'output window, operand 0']
    #allocation3 [shape = 's32[2]{0}', space=sflag, size = 0x8, scoped, tag = 'scoped memory for tpu_custom_call.1']
    %8 = vsyncpa [#allocation3], 0
    %s9 = scalar_lea.sflag [#allocation3], 1
    %10 = vsyncpa %s9, 0
    loop: start=0, step=1, limit=4
    $region2: #{tpu_custom_call.1} parent=1 // loop_pre_header
      _
    $region3: #{tpu_custom_call.1} parent=1 // loop_header
      %s12 = sphi 0, %s16
      %p13 = scmp.ge.s32.totalorder %s12, 4
      %s22 = sphi 0, %s24
      %s25 = sphi 0, %s22
      %s26 = sphi 0, %s25
      %s42 = sphi 0, %s26
      %s46 = sphi 0, %s46
      %s48 = sphi 0, %s46
      %s49 = sphi 0, %s48
      %s63 = sphi 0, %s49
      %s67 = sphi 0, %s67
      %s69 = sphi 0, %s67
      %s70 = sphi 0, %s69
      %s84 = sphi 0, %s70
      %s90 = sphi 0, %s92
      %s93 = sphi 0, %s90
      %s94 = sphi 0, %s93
      %s110 = sphi 0, %s94
    $region4: #{tpu_custom_call.1} parent=1 // loop_header_branch
      %15 = sbr.rel (%p13) target = $region8
    $region5: #{tpu_custom_call.1} parent=1 // loop_body
      %s17 = ssub.s32 %s12, 1
      %s18 = ssub.s32 %s12, 2
      %s19 = sadd.s32 %s12, 1
      %s20 = ssub.s32 %s12, %s19
      %p21 = scmp.eq.s32.totalorder %s20, 0
      %s23 = sadd.s32 %s22, 1
      %s24 = scalar_select %p21, %s22, %s23
      %p27 = pneg %p21
      %p28 = scmp.eq.s32.totalorder %s12, 1
      %p29 = por %p27, %p28
      %p30 = scmp.ne.s32.totalorder %s22, %s25
      %p31 = scmp.eq.s32.totalorder %s12, 0
      %p32 = por %p30, %p31
      %p33 = scmp.ne.s32.totalorder %s22, %s25
      %p34 = scmp.eq.s32.totalorder %s17, 1
      %p35 = por %p33, %p34
      %p36 = scmp.ne.s32.totalorder %s25, %s26
      %p37 = scmp.eq.s32.totalorder %s17, 0
      %p38 = por %p36, %p37
      %p39 = scmp.ne.s32.totalorder %s25, %s26
      %p40 = scmp.eq.s32.totalorder %s18, 1
      %p41 = por %p39, %p40
      %p43 = scmp.ne.s32.totalorder %s26, %s42
      %p44 = scmp.eq.s32.totalorder %s18, 0
      %p45 = por %p43, %p44
      %s47 = sadd.s32 %s46, 1
      %p50 = scmp.eq.s32.totalorder %s12, 1
      %p51 = scmp.ne.s32.totalorder %s46, %s48
      %p52 = scmp.eq.s32.totalorder %s12, 0
      %p53 = por %p51, %p52
      %p54 = scmp.ne.s32.totalorder %s46, %s48
      %p55 = scmp.eq.s32.totalorder %s17, 1
      %p56 = por %p54, %p55
      %p57 = scmp.ne.s32.totalorder %s48, %s49
      %p58 = scmp.eq.s32.totalorder %s17, 0
      %p59 = por %p57, %p58
      %p60 = scmp.ne.s32.totalorder %s48, %s49
      %p61 = scmp.eq.s32.totalorder %s18, 1
      %p62 = por %p60, %p61
      %p64 = scmp.ne.s32.totalorder %s49, %s63
      %p65 = scmp.eq.s32.totalorder %s18, 0
      %p66 = por %p64, %p65
      %s68 = sadd.s32 %s67, 1
      %p71 = scmp.eq.s32.totalorder %s12, 1
      %p72 = scmp.ne.s32.totalorder %s67, %s69
      %p73 = scmp.eq.s32.totalorder %s12, 0
      %p74 = por %p72, %p73
      %p75 = scmp.ne.s32.totalorder %s67, %s69
      %p76 = scmp.eq.s32.totalorder %s17, 1
      %p77 = por %p75, %p76
      %p78 = scmp.ne.s32.totalorder %s69, %s70
      %p79 = scmp.eq.s32.totalorder %s17, 0
      %p80 = por %p78, %p79
      %p81 = scmp.ne.s32.totalorder %s69, %s70
      %p82 = scmp.eq.s32.totalorder %s18, 1
      %p83 = por %p81, %p82
      %p85 = scmp.ne.s32.totalorder %s70, %s84
      %p86 = scmp.eq.s32.totalorder %s18, 0
      %p87 = por %p85, %p86
      %s88 = ssub.s32 %s12, %s19
      %p89 = scmp.eq.s32.totalorder %s88, 0
      %s91 = sadd.s32 %s90, 1
      %s92 = scalar_select %p89, %s90, %s91
      %p95 = pneg %p89
      %p96 = scmp.eq.s32.totalorder %s12, 1
      %p97 = por %p95, %p96
      %p98 = scmp.ne.s32.totalorder %s90, %s93
      %p99 = scmp.eq.s32.totalorder %s12, 0
      %p100 = por %p98, %p99
      %p101 = scmp.ne.s32.totalorder %s90, %s93
      %p102 = scmp.eq.s32.totalorder %s17, 1
      %p103 = por %p101, %p102
      %p104 = scmp.ne.s32.totalorder %s93, %s94
      %p105 = scmp.eq.s32.totalorder %s17, 0
      %p106 = por %p104, %p105
      %p107 = scmp.ne.s32.totalorder %s93, %s94
      %p108 = scmp.eq.s32.totalorder %s18, 1
      %p109 = por %p107, %p108
      %p111 = scmp.ne.s32.totalorder %s94, %s110
      %p112 = scmp.eq.s32.totalorder %s18, 0
      %p113 = por %p111, %p112
      %p114 = scmp.le.s32.totalorder 1, %s12
      %p115 = scmp.lt.s32.totalorder %s12, 3
      %p116 = pnand %p114, %p115
      %p117 = pneg %p116
      // Predicated region
      $region9: #{tpu_custom_call.1} parent=5 // pred_check
        _
      $region10: #{tpu_custom_call.1} parent=5 // pred_check_branch
        %119 = sbr.rel (%p116) target = $region12
      $region11: #{tpu_custom_call.1} parent=5 // pred_region
        %s120 = ssub.s32 %s12, 1
        // Predicated region
        $region13: #{tpu_custom_call.1} parent=11 // pred_check
          %p121 = pneg %p59
        $region14: #{tpu_custom_call.1} parent=11 // pred_check_branch
          %123 = sbr.rel (%p121) target = $region16
        $region15: #{tpu_custom_call.1} parent=11 // pred_region
          _
        $region16: #{tpu_custom_call.1} parent=11 // pred_fallthru
          _
        // Predicated region
        $region17: #{tpu_custom_call.1} parent=11 // pred_check
          %p124 = pneg %p80
        $region18: #{tpu_custom_call.1} parent=11 // pred_check_branch
          %126 = sbr.rel (%p124) target = $region20
        $region19: #{tpu_custom_call.1} parent=11 // pred_region
          _
        $region20: #{tpu_custom_call.1} parent=11 // pred_fallthru
          _
      $region12: #{tpu_custom_call.1} parent=5 // pred_fallthru
        _
      %p127 = scmp.lt.s32.totalorder %s12, 2
      // Predicated region
      $region21: #{tpu_custom_call.1} parent=5 // pred_check
        %p128 = pneg %p127
      $region22: #{tpu_custom_call.1} parent=5 // pred_check_branch
        %130 = sbr.rel (%p128) target = $region24
      $region23: #{tpu_custom_call.1} parent=5 // pred_region
        // Predicated region
        $region25: #{tpu_custom_call.1} parent=23 // pred_check
          %p131 = pneg %p32
        $region26: #{tpu_custom_call.1} parent=23 // pred_check_branch
          %133 = sbr.rel (%p131) target = $region28
        $region27: #{tpu_custom_call.1} parent=23 // pred_region
          %p134 = scmp.lt.s32.totalorder %s12, 1
          %s135 = scalar_select %p134, %s12, 1
          %s136 = scalar_lea.vmem %s0, %s135
        $region28: #{tpu_custom_call.1} parent=23 // pred_fallthru
          _
      $region24: #{tpu_custom_call.1} parent=5 // pred_fallthru
        _
      %p137 = scmp.le.s32.totalorder 1, %s12
      %p138 = scmp.lt.s32.totalorder %s12, 3
      %p139 = pnand %p137, %p138
      %p140 = pneg %p139
      // Predicated region
      $region29: #{tpu_custom_call.1} parent=5 // pred_check
        _
      $region30: #{tpu_custom_call.1} parent=5 // pred_check_branch
        %142 = sbr.rel (%p139) target = $region32
      $region31: #{tpu_custom_call.1} parent=5 // pred_region
        %s143 = ssub.s32 %s12, 1
        %p144 = scmp.lt.s32.totalorder %s17, 1
        %s145 = scalar_select %p144, %s17, 1
        %s146 = scalar_lea.vmem %s0, %s145
        %p147 = pneg %p38
        %p148 = pneg %p35
        %p149 = pneg %p59
        %p150 = pneg %p56
        %p151 = pneg %p80
        %p152 = pneg %p77
        %p153 = pneg %p106
        %p154 = pneg %p103
        %s155 = sand.u32 %s93, 1
        %s156 = scalar_lea.sflag [#allocation3], %s155
        %s157 = sand.u32 %s93, 1
        %s158 = smul.addr %s157, 56
        %s159 = scalar_lea.vmem [#allocation2], %s158
        %p160 = scmp.lt.s32.totalorder %s17, 1
        %s161 = scalar_select %p160, %s17, 1
        %s162 = scalar_lea.vmem %s0, %s161
        %v163 = vld [vmem:[%s162] sm:$0x1]
        %v164 = vld [vmem:[%s1] sm:$0xff]
        %v165 = vld [vmem:[%s1 + $0x8] sm:$0xff]
        %v166 = vld [vmem:[%s1 + $0x10] sm:$0xff]
        %v167 = vld [vmem:[%s1 + $0x18] sm:$0xff]
        %v168 = vld [vmem:[%s1 + $0x20] sm:$0xff]
        %v169 = vld [vmem:[%s1 + $0x28] sm:$0xff]
        %v170 = vld [vmem:[%s1 + $0x30] sm:$0x3]
        %v171 = vld [vmem:[%s2] sm:$0xff]
        %v172 = vld [vmem:[%s2 + $0x8] sm:$0xff]
        %v173 = vld [vmem:[%s2 + $0x10] sm:$0xff]
        %v174 = vld [vmem:[%s2 + $0x18] sm:$0xff]
        %v175 = vld [vmem:[%s2 + $0x20] sm:$0xff]
        %v176 = vld [vmem:[%s2 + $0x28] sm:$0xff]
        %v177 = vld [vmem:[%s2 + $0x30] sm:$0x3]
        %vm178 = vcmp.lt.f32.partialorder %v163, 5.0
        %v179 = vmul.f32 %v163, 0.62831855
        %v180 = vand.u32 2147483647, %v179
        %vm181 = vcmp.le.f32.partialorder %v180, 0.7853982
        %vm182 = vcmp.lt.s32.totalorder %v179, 0
        %v183 = vand.u32 %v179, 2139095040
        %v184 = vshrl.u32 %v183, 23
        %v185 = vsub.s32 %v184, 127
        %v186 = vand.u32 2147483647, %v179
        %v187 = vand.u32 %v186, 8388607
        %v188 = vor.u32 %v187, 8388608
        %v189 = vsub.s32 0, %v188
        %v190 = vadd.s32 %v185, 1
        %vm191 = vcmp.gt.s32.totalorder %v190, 0
        %v192 = vsel %vm191, %v190, 0
        %v193 = vshrl.u32 %v192, 5
        %v194 = vand.u32 %v192, 31
        %v195 = vsub.s32 32, %v194
        %v196 = vshrl.u32 683565275, %v195
        %v197 = vshll.u32 683565275, %v194
        %v198 = vshrl.u32 2475754826, %v195
        %v199 = vor.u32 %v197, %v198
        %v200 = vshll.u32 2475754826, %v194
        %v201 = vshrl.u32 2131351028, %v195
        %v202 = vor.u32 %v200, %v201
        %v203 = vshll.u32 2131351028, %v194
        %v204 = vshrl.u32 2102212464, %v195
        %v205 = vor.u32 %v203, %v204
        %v206 = vshll.u32 2102212464, %v194
        %v207 = vshrl.u32 920167782, %v195
        %v208 = vor.u32 %v206, %v207
        %v209 = vshll.u32 920167782, %v194
        %v210 = vshrl.u32 1326507024, %v195
        %v211 = vor.u32 %v209, %v210
        %vm212 = vcmp.lt.s32.totalorder %v193, 1
        %vm213 = vcmp.lt.s32.totalorder %v193, 2
        %vm214 = vcmp.lt.s32.totalorder %v193, 3
        %vm215 = vcmp.lt.s32.totalorder %v193, 4
        %v216 = vsel %vm212, %v196, %v199
        %v217 = vsel %vm215, %v205, 2102212464
        %v218 = vsel %vm214, %v202, %v217
        %v219 = vsel %vm213, %v216, %v218
        %v220 = vsel %vm212, %v199, %v202
        %v221 = vsel %vm215, %v208, 920167782
        %v222 = vsel %vm214, %v205, %v221
        %v223 = vsel %vm213, %v220, %v222
        %v224 = vsel %vm212, %v202, %v205
        %v225 = vsel %vm215, %v211, 1326507024
        %v226 = vsel %vm214, %v208, %v225
        %v227 = vsel %vm213, %v224, %v226
        %v228 = vshll.u32 %v188, 8
        %v229 = vmul.u32.u64.compose %v228, %v227
        %v230 = vextract.low.u32 %v229
        %v231 = vextract.high.u32 %v229
        %v232 = vmul.u32.u64.compose %v228, %v223
        %v233 = vextract.low.u32 %v232
        %v234 = vextract.high.u32 %v232
        %v235 = vmul.u32 %v228, %v219
        %v236 = vadd.s32 %v231, %v233
        %vm237 = vc.u32 %v231, %v233
        %v238 = vadd.s32 %v234, 1
        %v239 = vsel %vm237, %v238, %v234
        %v240 = vadd.s32 %v235, %v239
        %v241 = vadd.s32 %v240, 536870912
        %v242 = vshrl.u32 %v241, 30
        %v243 = vshll.u32 %v242, 30
        %v244 = vsub.s32 %v240, %v243
        %vm245 = vcmp.lt.s32.totalorder %v244, 0
        %v246 = vsub.s32 0, %v244
        %v247 = vsel %vm245, %v246, %v244
        %v248 = vclz %v247
        %v249 = vsub.s32 %v248, 2
        %vm250 = vcmp.gt.s32.totalorder 0, %v249
        %v251 = vsel %vm250, 0, %v249
        %v252 = vsub.s32 32, %v251
        %v253 = vshll.u32 %v244, %v251
        %v254 = vshrl.u32 %v236, %v252
        %v255 = vor.u32 %v253, %v254
        %v256 = vsub.s32 4294967266, %v251
        %v257 = vadd.s32 %v256, 127
        %v258 = vshll.u32 %v257, 23
        %v259 = vor.u32 4788187, %v258
        %v260 = vand.u32 2147483647, %v259
        %v262 = vcvt.s32.f32 %v255
        %v263 = vmul.f32 %v262, %v260
        %v264 = vxor.u32 %v263, 2147483648
        %v265 = vsel %vm182, %v264, %v263
        %v266 = vsub.s32 4, %v242
        %v267 = vsel %vm182, %v266, %v242
        %v268 = vsel %vm181, %v179, %v265
        %v269 = vsel %vm181, 0, %v267
        %v270 = vcosq.f32.pop %v268
        %v271 = vsinq.f32.pop %v268
        %vm272 = vweird.f32 %v179
        %v273 = vand.u32 %v269, 3
        %vm274 = vcmp.lt.s32.totalorder %v273, 2
        %vm275 = vcmp.eq.s32.totalorder %v273, 0
        %v276 = vxor.u32 %v271, 2147483648
        %v277 = vsel %vm275, %v270, %v276
        %vm278 = vcmp.eq.s32.totalorder %v273, 2
        %v279 = vxor.u32 %v270, 2147483648
        %v280 = vsel %vm278, %v279, %v271
        %v281 = vsel %vm274, %v277, %v280
        %v282 = vsel %vm272, nan, %v281
        %v283 = vmul.f32 %v282, 0.5
        %v284 = vadd.f32 %v283, 0.5
        %v285 = vsel %vm178, %v284, 0.0
        %v286 = vsub.f32 0.0, %v163
        %v287 = vmul.f32 %v286, 1.442695
        %v288 = vpow.pop %v287
        %v290 = vlaneseq
        %v291 = vshrl.u32 %v290, 7
        %v292 = vsub.s32 0, %v291
        %v293 = vrot.slane %v288, %v292
        %296 = vset.pattern.permute.xlu0 0
        %297 = vperm.xlu0 %296, %v164
        %v298 = vpop.permute.xlu0 %297
        %301 = vset.pattern.permute.xlu0 0
        %302 = vperm.xlu0 %301, %v165
        %v303 = vpop.permute.xlu0 %302
        %306 = vset.pattern.permute.xlu0 0
        %307 = vperm.xlu0 %306, %v166
        %v308 = vpop.permute.xlu0 %307
        %311 = vset.pattern.permute.xlu0 0
        %312 = vperm.xlu0 %311, %v167
        %v313 = vpop.permute.xlu0 %312
        %316 = vset.pattern.permute.xlu0 0
        %317 = vperm.xlu0 %316, %v168
        %v318 = vpop.permute.xlu0 %317
        %321 = vset.pattern.permute.xlu0 0
        %322 = vperm.xlu0 %321, %v169
        %v323 = vpop.permute.xlu0 %322
        %326 = vset.pattern.permute.xlu0 0
        %327 = vperm.xlu0 %326, %v170
        %v328 = vpop.permute.xlu0 %327
        %v330 = vsub.f32 %v293, %v298
        %v331 = vsub.f32 %v293, %v303
        %v332 = vsub.f32 %v293, %v308
        %v333 = vsub.f32 %v293, %v313
        %v334 = vsub.f32 %v293, %v318
        %v335 = vsub.f32 %v293, %v323
        %v336 = vsub.f32 %v293, %v328
        %v337 = vmul.f32 %v330, %v330
        %v338 = vmul.f32 %v331, %v331
        %v339 = vmul.f32 %v332, %v332
        %v340 = vmul.f32 %v333, %v333
        %v341 = vmul.f32 %v334, %v334
        %v342 = vmul.f32 %v335, %v335
        %v343 = vmul.f32 %v336, %v336
        %345 = vset.pattern.permute.xlu0 0
        %346 = vperm.xlu0 %345, %v171
        %v347 = vpop.permute.xlu0 %346
        %350 = vset.pattern.permute.xlu0 0
        %351 = vperm.xlu0 %350, %v172
        %v352 = vpop.permute.xlu0 %351
        %355 = vset.pattern.permute.xlu0 0
        %356 = vperm.xlu0 %355, %v173
        %v357 = vpop.permute.xlu0 %356
        %360 = vset.pattern.permute.xlu0 0
        %361 = vperm.xlu0 %360, %v174
        %v362 = vpop.permute.xlu0 %361
        %365 = vset.pattern.permute.xlu0 0
        %366 = vperm.xlu0 %365, %v175
        %v367 = vpop.permute.xlu0 %366
        %370 = vset.pattern.permute.xlu0 0
        %371 = vperm.xlu0 %370, %v176
        %v372 = vpop.permute.xlu0 %371
        %375 = vset.pattern.permute.xlu0 0
        %376 = vperm.xlu0 %375, %v177
        %v377 = vpop.permute.xlu0 %376
        %v379 = vmul.f32 %v347, %v337
        %v380 = vmul.f32 %v352, %v338
        %v381 = vmul.f32 %v357, %v339
        %v382 = vmul.f32 %v362, %v340
        %v383 = vmul.f32 %v367, %v341
        %v384 = vmul.f32 %v372, %v342
        %v385 = vmul.f32 %v377, %v343
        %v386 = vmul.f32 %v379, 1.442695
        %v387 = vpow.pop %v386
        %v388 = vmul.f32 %v380, 1.442695
        %v389 = vpow.pop %v388
        %v390 = vmul.f32 %v381, 1.442695
        %v391 = vpow.pop %v390
        %v392 = vmul.f32 %v382, 1.442695
        %v393 = vpow.pop %v392
        %v394 = vmul.f32 %v383, 1.442695
        %v395 = vpow.pop %v394
        %v396 = vmul.f32 %v384, 1.442695
        %v397 = vpow.pop %v396
        %v398 = vmul.f32 %v385, 1.442695
        %v399 = vpow.pop %v398
        %v401 = vlaneseq
        %v402 = vshrl.u32 %v401, 7
        %v403 = vsub.s32 0, %v402
        %v404 = vrot.slane %v285, %v403
        %v406 = vmul.f32 %v404, %v387
        %v407 = vmul.f32 %v404, %v389
        %v408 = vmul.f32 %v404, %v391
        %v409 = vmul.f32 %v404, %v393
        %v410 = vmul.f32 %v404, %v395
        %v411 = vmul.f32 %v404, %v397
        %v412 = vmul.f32 %v404, %v399
        %413 = vst [vmem:[%s159] sm:$0xff] %v406
        %414 = vst [vmem:[%s159 + $0x8] sm:$0xff] %v407
        %415 = vst [vmem:[%s159 + $0x10] sm:$0xff] %v408
        %416 = vst [vmem:[%s159 + $0x18] sm:$0xff] %v409
        %417 = vst [vmem:[%s159 + $0x20] sm:$0xff] %v410
        %418 = vst [vmem:[%s159 + $0x28] sm:$0xff] %v411
        %419 = vst [vmem:[%s159 + $0x30] sm:$0x3] %v412
        %s420 = sand.u32 %s93, 1
        %s421 = scalar_lea.sflag [#allocation3], %s420
        %s422 = sand.u32 %s93, 1
        %s423 = smul.addr %s422, 56
        %s424 = scalar_lea.vmem [#allocation2], %s423
        // Predicated region
        $region33: #{tpu_custom_call.1} parent=31 // pred_check
          %p425 = pneg %p103
        $region34: #{tpu_custom_call.1} parent=31 // pred_check_branch
          %427 = sbr.rel (%p425) target = $region36
        $region35: #{tpu_custom_call.1} parent=31 // pred_region
          %s429 = ssub.s32 896, 896
          %430 = vsyncadd %s421, %s429
          %s431 = smul.addr %s17, 128
          %s432 = scalar_lea.hbm %s3, %s431
          %s433 = sshll.u32 %s424, 4
          %s434 = int_to_ptr.vmem [resolvable:$true] %s433
          %439 = dma.vmem_to_hbm [thread:$0]  %s434, 896, %s432, %s421, 128, 256, 8
        $region36: #{tpu_custom_call.1} parent=31 // pred_fallthru
          _
      $region32: #{tpu_custom_call.1} parent=5 // pred_fallthru
        _
      %p440 = scmp.le.s32.totalorder 2, %s12
      // Predicated region
      $region37: #{tpu_custom_call.1} parent=5 // pred_check
        %p441 = pneg %p440
      $region38: #{tpu_custom_call.1} parent=5 // pred_check_branch
        %443 = sbr.rel (%p441) target = $region40
      $region39: #{tpu_custom_call.1} parent=5 // pred_region
        %s444 = ssub.s32 %s12, 2
        // Predicated region
        $region41: #{tpu_custom_call.1} parent=39 // pred_check
          %p445 = pneg %p109
        $region42: #{tpu_custom_call.1} parent=39 // pred_check_branch
          %447 = sbr.rel (%p445) target = $region44
        $region43: #{tpu_custom_call.1} parent=39 // pred_region
          %s448 = sand.u32 %s94, 1
          %s449 = scalar_lea.sflag [#allocation3], %s448
          %s450 = sand.u32 %s94, 1
          %s451 = smul.addr %s450, 56
          %s452 = scalar_lea.vmem [#allocation2], %s451
          %453 = dma.done %s449, 896
        $region44: #{tpu_custom_call.1} parent=39 // pred_fallthru
          _
      $region40: #{tpu_custom_call.1} parent=5 // pred_fallthru
        _
    $region6: #{tpu_custom_call.1} parent=1 // loop_footer
      %s16 = sadd.s32 1, %s12
    $region7: #{tpu_custom_call.1} parent=1 // loop_footer_branch
      %11 = sbr.rel target = $region3
    $region8: #{tpu_custom_call.1} parent=1 // loop_exit
      _
    %454 = vsyncpa [#allocation3], 1
    %s455 = scalar_lea.sflag [#allocation3], 1
    %456 = vsyncpa %s455, 1

</llo_original>
